<compile_context>
chip_gen: v7x
topology: tpu7x:2x2x1
jax: 0.10.0
libtpu: 0.0.40
codegen_flags: <defaults>
</compile_context>

<pallas_src>
import functools

import jax
import jax.numpy as jnp
from jax.experimental import pallas as pl
from jax.experimental.pallas import tpu as pltpu

IGNORE_INDEX = 255


def _ce_kernel(logits_ref, target_ref, sum_ref, cnt_ref, *, hw, tile_hw):
    """Cross-entropy partial-sum kernel.

    logits_ref : (1, C, tile_hw)  float  -- one image, one pixel tile (lanes)
    target_ref : (1, 1, tile_hw)  int32  -- lane-dense labels
    sum_ref    : (1, 1, tile_hw)  f32    -- per-lane running loss sum (per image)
    cnt_ref    : (1, 1, tile_hw)  f32    -- per-lane running valid-pixel count
    """
    j = pl.program_id(1)

    @pl.when(j == 0)
    def _():
        sum_ref[...] = jnp.zeros_like(sum_ref)
        cnt_ref[...] = jnp.zeros_like(cnt_ref)

    x = logits_ref[0].astype(jnp.float32)          # (C, T) classes on sublanes
    t = target_ref[0]                              # (1, T) int32

    # numerically stable log-sum-exp over the class (sublane) axis
    m = jnp.max(x, axis=0, keepdims=True)                                # (1, T)
    lse = m + jnp.log(jnp.sum(jnp.exp(x - m), axis=0, keepdims=True))    # (1, T)

    # target-class logit via one-hot mask (no dynamic gather on TPU)
    cls_ids = jax.lax.broadcasted_iota(jnp.int32, x.shape, 0)            # (C, T)
    onehot = (cls_ids == t).astype(jnp.float32)
    tgt_logit = jnp.sum(x * onehot, axis=0, keepdims=True)               # (1, T)

    # validity: ignore_index, negative labels, and ragged tail beyond H*W
    lane = jax.lax.broadcasted_iota(jnp.int32, t.shape, 1)               # (1, T)
    pix = j * tile_hw + lane
    valid = jnp.logical_and(jnp.logical_and(t != IGNORE_INDEX, t >= 0),
                            pix < hw)
    vf = valid.astype(jnp.float32)
    per_pixel = jnp.where(valid, lse - tgt_logit, 0.0)                   # (1, T)

    # per-lane accumulation into the resident output blocks (no cross-lane
    # reduction inside the grid loop)
    sum_ref[...] = sum_ref[...] + per_pixel[None]
    cnt_ref[...] = cnt_ref[...] + vf[None]


def cross_entropy_loss(preds, target, *, tile_hw=2048):
    """preds: (N, C, H, W) float logits;  target: (N, H, W) int labels."""
    n, c, h, w = preds.shape
    hw = h * w

    # tile size: multiple of 128 lanes, no bigger than the (rounded-up) image
    tile = min(tile_hw, max(128, pl.cdiv(hw, 128) * 128))
    num_tiles = pl.cdiv(hw, tile)

    # free views -- no transpose, no padding, no extra HBM traffic
    logits = preds.reshape(n, c, hw)
    labels = target.reshape(n, 1, hw).astype(jnp.int32)

    kern = functools.partial(_ce_kernel, hw=hw, tile_hw=tile)

    sums, cnts = pl.pallas_call(
        kern,
        out_shape=(jax.ShapeDtypeStruct((n, 1, tile), jnp.float32),
                   jax.ShapeDtypeStruct((n, 1, tile), jnp.float32)),
        grid_spec=pltpu.PrefetchScalarGridSpec(
            num_scalar_prefetch=0,
            grid=(n, num_tiles),
            in_specs=[
                pl.BlockSpec((1, c, tile), lambda i, j: (i, 0, j)),
                pl.BlockSpec((1, 1, tile), lambda i, j: (i, 0, j)),
            ],
            out_specs=[
                pl.BlockSpec((1, 1, tile), lambda i, j: (i, 0, 0)),
                pl.BlockSpec((1, 1, tile), lambda i, j: (i, 0, 0)),
            ],
        ),
        compiler_params=pltpu.CompilerParams(
            dimension_semantics=("parallel", "arbitrary")),
    )(logits, labels)

    total = jnp.sum(sums)
    count = jnp.sum(cnts)
    return total / jnp.maximum(count, 1.0)


class SegLossPallas:
    """JAX/Pallas equivalent of Seg_Loss(args, input_size) with
    args.ohem=False, args.dsn=False, args.iouloss=False."""

    def __init__(self, iouloss=False, ohem=False, dsn=False,
                 input_size=None, ignore_index=IGNORE_INDEX):
        assert not iouloss, "Lovasz branch not implemented (see TODO)"
        assert not ohem, "OHEM branch not implemented (see TODO)"
        assert not dsn, "DSN branch not implemented"
        self.ignore_index = ignore_index

    def __call__(self, preds, target):
        loss = []
        loss.append(cross_entropy_loss(preds, target))
        return loss


def _reference_ce(preds, target):
    """Pure-JAX reference for a sanity check."""
    n, c, h, w = preds.shape
    logits = jnp.transpose(preds, (0, 2, 3, 1)).reshape(-1, c).astype(jnp.float32)
    labels = target.reshape(-1)
    logp = jax.nn.log_softmax(logits, axis=-1)
    valid = labels != IGNORE_INDEX
    safe = jnp.where(valid, labels, 0)
    nll = -jnp.take_along_axis(logp, safe[:, None], axis=-1)[:, 0]
    nll = jnp.where(valid, nll, 0.0)
    return jnp.sum(nll) / jnp.maximum(jnp.sum(valid.astype(jnp.float32)), 1.0)


if __name__ == "__main__":
    key = jax.random.PRNGKey(0)
    k1, k2, k3 = jax.random.split(key, 3)

    N, C, H, W = 2, 4, 16, 16
    preds = jax.random.normal(k1, (N, C, H, W), dtype=jnp.float32)
    target = jax.random.randint(k2, (N, H, W), 0, C, dtype=jnp.int32)
    # sprinkle some ignore_index pixels
    ignore_mask = jax.random.bernoulli(k3, 0.1, (N, H, W))
    target = jnp.where(ignore_mask, IGNORE_INDEX, target)

    seg_loss = SegLossPallas(iouloss=False, ohem=False, dsn=False,
                             input_size=(H, W))
    losses = seg_loss(preds, target)
    loss_val = jax.block_until_ready(losses[0])

    ref = _reference_ce(preds, target)
    assert jnp.allclose(loss_val, ref, rtol=1e-5, atol=1e-5), (loss_val, ref)

    print("KERNEL_OK")
</pallas_src>

<mosaic_0001>
module attributes {stable_mosaic.version = 11 : i64} {
  func.func @_ce_kernel(%arg0: i32, %arg1: i32, %arg2: memref<1x4x256xf32, #tpu.memory_space<vmem>>, %arg3: memref<1x1x256xi32, #tpu.memory_space<vmem>>, %arg4: memref<1x1x256xf32, #tpu.memory_space<vmem>>, %arg5: memref<1x1x256xf32, #tpu.memory_space<vmem>>) attributes {dimension_semantics = [#tpu.dimension_semantics<parallel>, #tpu.dimension_semantics<arbitrary>], iteration_bounds = array<i64: 2, 1>, scalar_prefetch = 0 : i64, scratch_operands = 0 : i64, tpu.core_type = #tpu.core_type<tc>, window_params = [{transform_indices = @transform_0, window_bounds = array<i64: 1, 4, 256>}, {transform_indices = @transform_1, window_bounds = array<i64: 1, 1, 256>}, {transform_indices = @transform_2, window_bounds = array<i64: 1, 1, 256>}, {transform_indices = @transform_3, window_bounds = array<i64: 1, 1, 256>}]} {
    %c0_i32 = arith.constant 0 : i32
    %0 = arith.cmpi eq, %arg1, %c0_i32 : i32
    %1 = arith.extui %0 : i1 to i32
    %c0_i32_0 = arith.constant 0 : i32
    %2 = arith.cmpi ne, %1, %c0_i32_0 : i32
    scf.if %2 {
      %cst_23 = arith.constant 0.000000e+00 : f32
      %49 = vector.broadcast %cst_23 : f32 to vector<1x1x256xf32>
      %c0_24 = arith.constant 0 : index
      %c0_25 = arith.constant 0 : index
      %c0_26 = arith.constant 0 : index
      %50 = vector.load %arg4[%c0_24, %c0_25, %c0_26] : memref<1x1x256xf32, #tpu.memory_space<vmem>>, vector<1x1x256xf32>
      tpu.vector_store %arg4[%c0_24, %c0_25, %c0_26], %49 {strides = array<i32>} : memref<1x1x256xf32, #tpu.memory_space<vmem>>, vector<1x1x256xf32>,
      %cst_27 = arith.constant 0.000000e+00 : f32
      %51 = vector.broadcast %cst_27 : f32 to vector<1x1x256xf32>
      %c0_28 = arith.constant 0 : index
      %c0_29 = arith.constant 0 : index
      %c0_30 = arith.constant 0 : index
      %52 = vector.load %arg5[%c0_28, %c0_29, %c0_30] : memref<1x1x256xf32, #tpu.memory_space<vmem>>, vector<1x1x256xf32>
      tpu.vector_store %arg5[%c0_28, %c0_29, %c0_30], %51 {strides = array<i32>} : memref<1x1x256xf32, #tpu.memory_space<vmem>>, vector<1x1x256xf32>,
    } else {
    }
    %c0 = arith.constant 0 : index
    %c0_1 = arith.constant 0 : index
    %c0_2 = arith.constant 0 : index
    %3 = vector.load %arg2[%c0, %c0_1, %c0_2] : memref<1x4x256xf32, #tpu.memory_space<vmem>>, vector<1x4x256xf32>
    %4 = vector.shape_cast %3 : vector<1x4x256xf32> to vector<4x256xf32>
    %c0_3 = arith.constant 0 : index
    %c0_4 = arith.constant 0 : index
    %c0_5 = arith.constant 0 : index
    %5 = vector.load %arg3[%c0_3, %c0_4, %c0_5] : memref<1x1x256xi32, #tpu.memory_space<vmem>>, vector<1x1x256xi32>
    %6 = vector.shape_cast %5 : vector<1x1x256xi32> to vector<1x256xi32>
    %cst = arith.constant dense<0xFF800000> : vector<256xf32>
    %7 = vector.multi_reduction <maximumf>, %4, %cst [0] : vector<4x256xf32> to vector<256xf32>
    %8 = vector.shape_cast %7 : vector<256xf32> to vector<1x256xf32>
    %9 = vector.broadcast %8 : vector<1x256xf32> to vector<4x256xf32>
    %10 = arith.subf %4, %9 : vector<4x256xf32>
    %11 = math.exp %10 : vector<4x256xf32>
    %cst_6 = arith.constant dense<0.000000e+00> : vector<256xf32>
    %12 = vector.multi_reduction <add>, %11, %cst_6 [0] : vector<4x256xf32> to vector<256xf32>
    %13 = vector.shape_cast %12 : vector<256xf32> to vector<1x256xf32>
    %14 = math.log %13 : vector<1x256xf32>
    %15 = arith.addf %8, %14 : vector<1x256xf32>
    %16 = tpu.iota {dimensions = array<i32: 0>} : vector<4x256xi32>
    %17 = vector.broadcast %6 : vector<1x256xi32> to vector<4x256xi32>
    %18 = arith.cmpi eq, %16, %17 : vector<4x256xi32>
    %19 = arith.extui %18 : vector<4x256xi1> to vector<4x256xi32>
    %20 = arith.sitofp %19 : vector<4x256xi32> to vector<4x256xf32>
    %21 = arith.mulf %4, %20 : vector<4x256xf32>
    %cst_7 = arith.constant dense<0.000000e+00> : vector<256xf32>
    %22 = vector.multi_reduction <add>, %21, %cst_7 [0] : vector<4x256xf32> to vector<256xf32>
    %23 = vector.shape_cast %22 : vector<256xf32> to vector<1x256xf32>
    %24 = tpu.iota {dimensions = array<i32: 1>} : vector<1x256xi32>
    %c256_i32 = arith.constant 256 : i32
    %25 = arith.muli %arg1, %c256_i32 : i32
    %26 = vector.broadcast %25 : i32 to vector<1x256xi32>
    %27 = arith.addi %26, %24 : vector<1x256xi32>
    %c255_i32 = arith.constant 255 : i32
    %28 = vector.broadcast %c255_i32 : i32 to vector<1x256xi32>
    %29 = arith.cmpi ne, %6, %28 : vector<1x256xi32>
    %c0_i32_8 = arith.constant 0 : i32
    %30 = vector.broadcast %c0_i32_8 : i32 to vector<1x256xi32>
    %31 = arith.cmpi sge, %6, %30 : vector<1x256xi32>
    %32 = arith.andi %29, %31 : vector<1x256xi1>
    %c256_i32_9 = arith.constant 256 : i32
    %33 = vector.broadcast %c256_i32_9 : i32 to vector<1x256xi32>
    %34 = arith.cmpi slt, %27, %33 : vector<1x256xi32>
    %35 = arith.andi %32, %34 : vector<1x256xi1>
    %36 = arith.extui %35 : vector<1x256xi1> to vector<1x256xi32>
    %37 = arith.sitofp %36 : vector<1x256xi32> to vector<1x256xf32>
    %38 = arith.subf %15, %23 : vector<1x256xf32>
    %cst_10 = arith.constant 0.000000e+00 : f32
    %39 = vector.broadcast %cst_10 : f32 to vector<1x256xf32>
    %40 = arith.select %35, %38, %39 : vector<1x256xi1>, vector<1x256xf32>
    %c0_11 = arith.constant 0 : index
    %c0_12 = arith.constant 0 : index
    %c0_13 = arith.constant 0 : index
    %41 = vector.load %arg4[%c0_11, %c0_12, %c0_13] : memref<1x1x256xf32, #tpu.memory_space<vmem>>, vector<1x1x256xf32>
    %42 = vector.shape_cast %40 : vector<1x256xf32> to vector<1x1x256xf32>
    %43 = arith.addf %41, %42 : vector<1x1x256xf32>
    %c0_14 = arith.constant 0 : index
    %c0_15 = arith.constant 0 : index
    %c0_16 = arith.constant 0 : index
    %44 = vector.load %arg4[%c0_14, %c0_15, %c0_16] : memref<1x1x256xf32, #tpu.memory_space<vmem>>, vector<1x1x256xf32>
    tpu.vector_store %arg4[%c0_14, %c0_15, %c0_16], %43 {strides = array<i32>} : memref<1x1x256xf32, #tpu.memory_space<vmem>>, vector<1x1x256xf32>,
    %c0_17 = arith.constant 0 : index
    %c0_18 = arith.constant 0 : index
    %c0_19 = arith.constant 0 : index
    %45 = vector.load %arg5[%c0_17, %c0_18, %c0_19] : memref<1x1x256xf32, #tpu.memory_space<vmem>>, vector<1x1x256xf32>
    %46 = vector.shape_cast %37 : vector<1x256xf32> to vector<1x1x256xf32>
    %47 = arith.addf %45, %46 : vector<1x1x256xf32>
    %c0_20 = arith.constant 0 : index
    %c0_21 = arith.constant 0 : index
    %c0_22 = arith.constant 0 : index
    %48 = vector.load %arg5[%c0_20, %c0_21, %c0_22] : memref<1x1x256xf32, #tpu.memory_space<vmem>>, vector<1x1x256xf32>
    tpu.vector_store %arg5[%c0_20, %c0_21, %c0_22], %47 {strides = array<i32>} : memref<1x1x256xf32, #tpu.memory_space<vmem>>, vector<1x1x256xf32>,
    return
  }
  func.func @transform_0(%arg0: i32, %arg1: i32) -> (i32, i32, i32) {
    %c0_i32 = arith.constant 0 : i32
    %c0_i32_0 = arith.constant 0 : i32
    return %arg0, %c0_i32, %arg1 : i32, i32, i32
  }
  func.func @transform_1(%arg0: i32, %arg1: i32) -> (i32, i32, i32) {
    %c0_i32 = arith.constant 0 : i32
    %c0_i32_0 = arith.constant 0 : i32
    return %arg0, %c0_i32, %arg1 : i32, i32, i32
  }
  func.func @transform_2(%arg0: i32, %arg1: i32) -> (i32, i32, i32) {
    %c0_i32 = arith.constant 0 : i32
    %c0_i32_0 = arith.constant 0 : i32
    %c0_i32_1 = arith.constant 0 : i32
    return %arg0, %c0_i32, %c0_i32_0 : i32, i32, i32
  }
  func.func @transform_3(%arg0: i32, %arg1: i32) -> (i32, i32, i32) {
    %c0_i32 = arith.constant 0 : i32
    %c0_i32_0 = arith.constant 0 : i32
    %c0_i32_1 = arith.constant 0 : i32
    return %arg0, %c0_i32, %c0_i32_0 : i32, i32, i32
  }
}

</mosaic_0001>

<llo_original>
// kernel: tpu_custom_call.1
$region0: #{tpu_custom_call.1}
  #allocation0 [shape = 'u32[]', space=smem, size = 0x4, offset = 0x4, fixed_abs, tag = 'smem constant byte address 0x4 - core index']
  #allocation1 [shape = 'u32[144,128]{1,0:T(1,128)}', space=vmem, size = 0x12000, scoped, tag = 'internal scratch']
  %s0 = inlined_call_operand.hbm [shape: f32[2,4,256], index: 0, kind: input, shape index: {}]
  %s1 = inlined_call_operand.hbm [shape: s32[2,1,256], index: 1, kind: input, shape index: {}]
  %s2 = inlined_call_operand.hbm [shape: f32[2,1,256], index: 2, kind: output, shape index: {0}]
  %s3 = inlined_call_operand.hbm [shape: f32[2,1,256], index: 3, kind: output, shape index: {1}]
  %4 = xla_tuple %s2, %s3
  %s5 = sld [smem:[#allocation0]]
  $region61: #{tpu_custom_call.1} parent=0
    _
  %s7 = ssub.s32 1, %s5
  %s8 = scalar_select 0, %s7, %s5
  $region1: #{tpu_custom_call.1} parent=0
    #allocation2 [shape = 'u8[8192]{0}', space=vmem, size = 0x2000, scoped, tag = 'input window, operand 0']
    #allocation3 [shape = 's32[2]{0}', space=sflag, size = 0x8, scoped, tag = 'scoped memory for tpu_custom_call.1']
    #allocation4 [shape = 's32[2]{0}', space=sflag, size = 0x8, scoped, tag = 'scoped memory for tpu_custom_call.1']
    #allocation5 [shape = 'u8[2048]{0}', space=vmem, size = 0x800, scoped, tag = 'input window, operand 1']
    #allocation6 [shape = 's32[2]{0}', space=sflag, size = 0x8, scoped, tag = 'scoped memory for tpu_custom_call.1']
    #allocation7 [shape = 'u8[2048]{0}', space=vmem, size = 0x800, scoped, tag = 'output window, operand 0']
    #allocation8 [shape = 'u8[2048]{0}', space=vmem, size = 0x800, scoped, tag = 'output window, operand 1']
    #allocation9 [shape = 's32[2]{0}', space=sflag, size = 0x8, scoped, tag = 'scoped memory for tpu_custom_call.1']
    %9 = vsyncpa [#allocation3], 0
    %s10 = scalar_lea.sflag [#allocation3], 1
    %11 = vsyncpa %s10, 0
    %12 = vsyncpa [#allocation6], 0
    %s13 = scalar_lea.sflag [#allocation6], 1
    %14 = vsyncpa %s13, 0
    %15 = vsyncpa [#allocation4], 0
    %s16 = scalar_lea.sflag [#allocation4], 1
    %17 = vsyncpa %s16, 0
    %18 = vsyncpa [#allocation9], 0
    %s19 = scalar_lea.sflag [#allocation9], 1
    %20 = vsyncpa %s19, 0
    loop: start=0, step=1, limit=4
    $region2: #{tpu_custom_call.1} parent=1 // loop_pre_header
      _
    $region3: #{tpu_custom_call.1} parent=1 // loop_header
      %s22 = sphi 0, %s26
      %p23 = scmp.ge.s32.totalorder %s22, 4
      %s29 = sphi 0, %s41
      %s30 = sphi 0, %s37
      %s31 = sphi 0, %s29
      %s32 = sphi 0, %s30
      %s33 = sphi 0, %s31
      %s34 = sphi 0, %s32
      %s46 = sphi 0, %s48
      %s49 = sphi 0, %s46
      %s50 = sphi 0, %s49
      %s66 = sphi 0, %s50
      %s74 = sphi 0, %s76
      %s77 = sphi 0, %s74
      %s78 = sphi 0, %s77
      %s94 = sphi 0, %s78
      %s100 = sphi 0, %s102
      %s103 = sphi 0, %s100
      %s104 = sphi 0, %s103
      %s120 = sphi 0, %s104
      %s126 = sphi 0, %s128
      %s129 = sphi 0, %s126
      %s130 = sphi 0, %s129
      %s146 = sphi 0, %s130
    $region4: #{tpu_custom_call.1} parent=1 // loop_header_branch
      %25 = sbr.rel (%p23) target = $region8
    $region5: #{tpu_custom_call.1} parent=1 // loop_body
      %s27 = ssub.s32 %s22, 1
      %s28 = ssub.s32 %s22, 2
      %s35 = sadd.s32 1, %s30
      %p36 = scmp.ge.s32.totalorder %s35, 1
      %s37 = scalar_select %p36, 0, %s35
      %s38 = sadd.s32 1, %s29
      %s39 = scalar_select %p36, %s38, %s29
      %p40 = scmp.ge.s32.totalorder %s39, 2
      %s41 = scalar_select %p40, 0, %s39
      %s42 = ssub.s32 %s29, %s41
      %s43 = ssub.s32 %s30, %s37
      %s44 = sor.u32 %s42, %s43
      %p45 = scmp.eq.s32.totalorder %s44, 0
      %s47 = sadd.s32 %s46, 1
      %s48 = scalar_select %p45, %s46, %s47
      %p51 = pneg %p45
      %p52 = scmp.eq.s32.totalorder %s22, 1
      %p53 = por %p51, %p52
      %p54 = scmp.ne.s32.totalorder %s46, %s49
      %p55 = scmp.eq.s32.totalorder %s22, 0
      %p56 = por %p54, %p55
      %p57 = scmp.ne.s32.totalorder %s46, %s49
      %p58 = scmp.eq.s32.totalorder %s27, 1
      %p59 = por %p57, %p58
      %p60 = scmp.ne.s32.totalorder %s49, %s50
      %p61 = scmp.eq.s32.totalorder %s27, 0
      %p62 = por %p60, %p61
      %p63 = scmp.ne.s32.totalorder %s49, %s50
      %p64 = scmp.eq.s32.totalorder %s28, 1
      %p65 = por %p63, %p64
      %p67 = scmp.ne.s32.totalorder %s50, %s66
      %p68 = scmp.eq.s32.totalorder %s28, 0
      %p69 = por %p67, %p68
      %s70 = ssub.s32 %s29, %s41
      %s71 = ssub.s32 %s30, %s37
      %s72 = sor.u32 %s70, %s71
      %p73 = scmp.eq.s32.totalorder %s72, 0
      %s75 = sadd.s32 %s74, 1
      %s76 = scalar_select %p73, %s74, %s75
      %p79 = pneg %p73
      %p80 = scmp.eq.s32.totalorder %s22, 1
      %p81 = por %p79, %p80
      %p82 = scmp.ne.s32.totalorder %s74, %s77
      %p83 = scmp.eq.s32.totalorder %s22, 0
      %p84 = por %p82, %p83
      %p85 = scmp.ne.s32.totalorder %s74, %s77
      %p86 = scmp.eq.s32.totalorder %s27, 1
      %p87 = por %p85, %p86
      %p88 = scmp.ne.s32.totalorder %s77, %s78
      %p89 = scmp.eq.s32.totalorder %s27, 0
      %p90 = por %p88, %p89
      %p91 = scmp.ne.s32.totalorder %s77, %s78
      %p92 = scmp.eq.s32.totalorder %s28, 1
      %p93 = por %p91, %p92
      %p95 = scmp.ne.s32.totalorder %s78, %s94
      %p96 = scmp.eq.s32.totalorder %s28, 0
      %p97 = por %p95, %p96
      %s98 = ssub.s32 %s29, %s41
      %p99 = scmp.eq.s32.totalorder %s98, 0
      %s101 = sadd.s32 %s100, 1
      %s102 = scalar_select %p99, %s100, %s101
      %p105 = pneg %p99
      %p106 = scmp.eq.s32.totalorder %s22, 1
      %p107 = por %p105, %p106
      %p108 = scmp.ne.s32.totalorder %s100, %s103
      %p109 = scmp.eq.s32.totalorder %s22, 0
      %p110 = por %p108, %p109
      %p111 = scmp.ne.s32.totalorder %s100, %s103
      %p112 = scmp.eq.s32.totalorder %s27, 1
      %p113 = por %p111, %p112
      %p114 = scmp.ne.s32.totalorder %s103, %s104
      %p115 = scmp.eq.s32.totalorder %s27, 0
      %p116 = por %p114, %p115
      %p117 = scmp.ne.s32.totalorder %s103, %s104
      %p118 = scmp.eq.s32.totalorder %s28, 1
      %p119 = por %p117, %p118
      %p121 = scmp.ne.s32.totalorder %s104, %s120
      %p122 = scmp.eq.s32.totalorder %s28, 0
      %p123 = por %p121, %p122
      %s124 = ssub.s32 %s29, %s41
      %p125 = scmp.eq.s32.totalorder %s124, 0
      %s127 = sadd.s32 %s126, 1
      %s128 = scalar_select %p125, %s126, %s127
      %p131 = pneg %p125
      %p132 = scmp.eq.s32.totalorder %s22, 1
      %p133 = por %p131, %p132
      %p134 = scmp.ne.s32.totalorder %s126, %s129
      %p135 = scmp.eq.s32.totalorder %s22, 0
      %p136 = por %p134, %p135
      %p137 = scmp.ne.s32.totalorder %s126, %s129
      %p138 = scmp.eq.s32.totalorder %s27, 1
      %p139 = por %p137, %p138
      %p140 = scmp.ne.s32.totalorder %s129, %s130
      %p141 = scmp.eq.s32.totalorder %s27, 0
      %p142 = por %p140, %p141
      %p143 = scmp.ne.s32.totalorder %s129, %s130
      %p144 = scmp.eq.s32.totalorder %s28, 1
      %p145 = por %p143, %p144
      %p147 = scmp.ne.s32.totalorder %s130, %s146
      %p148 = scmp.eq.s32.totalorder %s28, 0
      %p149 = por %p147, %p148
      %p150 = scmp.le.s32.totalorder 1, %s22
      %p151 = scmp.lt.s32.totalorder %s22, 3
      %p152 = pnand %p150, %p151
      %p153 = pneg %p152
      // Predicated region
      $region9: #{tpu_custom_call.1} parent=5 // pred_check
        _
      $region10: #{tpu_custom_call.1} parent=5 // pred_check_branch
        %155 = sbr.rel (%p152) target = $region12
      $region11: #{tpu_custom_call.1} parent=5 // pred_region
        %s156 = ssub.s32 %s22, 1
      $region12: #{tpu_custom_call.1} parent=5 // pred_fallthru
        _
      %p157 = scmp.lt.s32.totalorder %s22, 2
      // Predicated region
      $region13: #{tpu_custom_call.1} parent=5 // pred_check
        %p158 = pneg %p157
      $region14: #{tpu_custom_call.1} parent=5 // pred_check_branch
        %160 = sbr.rel (%p158) target = $region16
      $region15: #{tpu_custom_call.1} parent=5 // pred_region
        // Predicated region
        $region17: #{tpu_custom_call.1} parent=15 // pred_check
          %p161 = pneg %p56
        $region18: #{tpu_custom_call.1} parent=15 // pred_check_branch
          %163 = sbr.rel (%p161) target = $region20
        $region19: #{tpu_custom_call.1} parent=15 // pred_region
          %s164 = sand.u32 %s46, 1
          %s165 = scalar_lea.sflag [#allocation3], %s164
          %s166 = sand.u32 %s46, 1
          %s167 = smul.addr %s166, 8
          %s168 = scalar_lea.vmem [#allocation2], %s167
          %s169 = smul.u32 2, %s30
          %s171 = ssub.s32 128, 128
          %172 = vsyncadd %s165, %s171
          %s173 = smul.addr %s29, 2
          %s174 = sadd.s32 %s169, %s173
          %s175 = smul.addr %s174, 64
          %s176 = scalar_lea.hbm %s0, %s175
          %s178 = sshll.u32 %s168, 4
          %s179 = int_to_ptr.vmem [resolvable:$true] %s178
          %181 = dma.hbm_to_vmem [thread:$0]  %s176, 128, %s179, %s165
        $region20: #{tpu_custom_call.1} parent=15 // pred_fallthru
          _
        // Predicated region
        $region21: #{tpu_custom_call.1} parent=15 // pred_check
          %p182 = pneg %p84
        $region22: #{tpu_custom_call.1} parent=15 // pred_check_branch
          %184 = sbr.rel (%p182) target = $region24
        $region23: #{tpu_custom_call.1} parent=15 // pred_region
          %s185 = sand.u32 %s74, 1
          %s186 = scalar_lea.sflag [#allocation6], %s185
          %s187 = sand.u32 %s74, 1
          %s188 = smul.addr %s187, 2
          %s189 = scalar_lea.vmem [#allocation5], %s188
          %s190 = smul.u32 2, %s30
          %s192 = ssub.s32 32, 32
          %193 = vsyncadd %s186, %s192
          %s194 = smul.addr %s29, 2
          %s195 = sadd.s32 %s190, %s194
          %s196 = smul.addr %s195, 16
          %s197 = scalar_lea.hbm %s1, %s196
          %s199 = sshll.u32 %s189, 4
          %s200 = int_to_ptr.vmem [resolvable:$true] %s199
          %202 = dma.hbm_to_vmem [thread:$0]  %s197, 32, %s200, %s186
        $region24: #{tpu_custom_call.1} parent=15 // pred_fallthru
          _
      $region16: #{tpu_custom_call.1} parent=5 // pred_fallthru
        _
      %p203 = scmp.le.s32.totalorder 1, %s22
      %p204 = scmp.lt.s32.totalorder %s22, 3
      %p205 = pnand %p203, %p204
      %p206 = pneg %p205
      // Predicated region
      $region25: #{tpu_custom_call.1} parent=5 // pred_check
        _
      $region26: #{tpu_custom_call.1} parent=5 // pred_check_branch
        %208 = sbr.rel (%p205) target = $region28
      $region27: #{tpu_custom_call.1} parent=5 // pred_region
        %s209 = ssub.s32 %s22, 1
        %s210 = sand.u32 %s49, 1
        %s211 = scalar_lea.sflag [#allocation3], %s210
        %s212 = sand.u32 %s49, 1
        %s213 = smul.addr %s212, 8
        %s214 = scalar_lea.vmem [#allocation2], %s213
        // Predicated region
        $region29: #{tpu_custom_call.1} parent=27 // pred_check
          %p215 = pneg %p62
        $region30: #{tpu_custom_call.1} parent=27 // pred_check_branch
          %217 = sbr.rel (%p215) target = $region32
        $region31: #{tpu_custom_call.1} parent=27 // pred_region
          %218 = dma.done %s211, 128
        $region32: #{tpu_custom_call.1} parent=27 // pred_fallthru
          _
        %s219 = sand.u32 %s77, 1
        %s220 = scalar_lea.sflag [#allocation6], %s219
        %s221 = sand.u32 %s77, 1
        %s222 = smul.addr %s221, 2
        %s223 = scalar_lea.vmem [#allocation5], %s222
        // Predicated region
        $region33: #{tpu_custom_call.1} parent=27 // pred_check
          %p224 = pneg %p90
        $region34: #{tpu_custom_call.1} parent=27 // pred_check_branch
          %226 = sbr.rel (%p224) target = $region36
        $region35: #{tpu_custom_call.1} parent=27 // pred_region
          %227 = dma.done %s220, 32
        $region36: #{tpu_custom_call.1} parent=27 // pred_fallthru
          _
        %s228 = sand.u32 %s49, 1
        %s229 = scalar_lea.sflag [#allocation3], %s228
        %s230 = sand.u32 %s49, 1
        %s231 = smul.addr %s230, 8
        %s232 = scalar_lea.vmem [#allocation2], %s231
        %p233 = pneg %p62
        %p234 = pneg %p59
        %s235 = sand.u32 %s77, 1
        %s236 = scalar_lea.sflag [#allocation6], %s235
        %s237 = sand.u32 %s77, 1
        %s238 = smul.addr %s237, 2
        %s239 = scalar_lea.vmem [#allocation5], %s238
        %p240 = pneg %p90
        %p241 = pneg %p87
        %p242 = pneg %p116
        %p243 = pneg %p113
        %s244 = sand.u32 %s103, 1
        %s245 = scalar_lea.sflag [#allocation4], %s244
        %s246 = sand.u32 %s103, 1
        %s247 = smul.addr %s246, 2
        %s248 = scalar_lea.vmem [#allocation7], %s247
        %p249 = pneg %p142
        %p250 = pneg %p139
        %s251 = sand.u32 %s129, 1
        %s252 = scalar_lea.sflag [#allocation9], %s251
        %s253 = sand.u32 %s129, 1
        %s254 = smul.addr %s253, 2
        %s255 = scalar_lea.vmem [#allocation8], %s254
        %s256 = smul.u32 2, %s32
        %s257 = smul.u32 2, %s32
        %p258 = scmp.eq.s32.totalorder %s32, 0
        // Predicated region
        $region37: #{tpu_custom_call.1} parent=27 // pred_check
          %p259 = pneg %p258
        $region38: #{tpu_custom_call.1} parent=27 // pred_check_branch
          %261 = sbr.rel (%p259) target = $region40
        $region39: #{tpu_custom_call.1} parent=27 // pred_region
          %v262 = vlaneseq
          %vm263 = vcmp.ge.s32.totalorder %v262, 0
          %vm264 = vcmp.lt.s32.totalorder %v262, 256
          %vm265 = vmand %vm263, %vm264
          %266 = vst.msk [vmem:[%s248] sm:$0x3] %vm265, 0.0
          %267 = vst.msk [vmem:[%s255] sm:$0x3] %vm265, 0.0
        $region40: #{tpu_custom_call.1} parent=27 // pred_fallthru
          _
        %v268 = vld [vmem:[%s214] sm:$0xff]
        %v269 = vld [vmem:[%s223] sm:$0x3]
        %v271 = vcombine.high %v268, %v268
        %vm273 = vcmask 1043456
        %v274 = vsel %vm273, %v268, -inf
        %v275 = vrot.slane %v274, 4
        %v276 = vmax.f32 %v274, %v275
        %v277 = vrot.slane %v276, 2
        %v278 = vmax.f32 %v276, %v277
        %v279 = vrot.slane %v278, 1
        %v280 = vmax.f32 %v278, %v279
        %v281 = vsel %vm273, %v271, -inf
        %v282 = vrot.slane %v281, 4
        %v283 = vmax.f32 %v281, %v282
        %v284 = vrot.slane %v283, 2
        %v285 = vmax.f32 %v283, %v284
        %v286 = vrot.slane %v285, 1
        %v287 = vmax.f32 %v285, %v286
        %v290 = vcombine.low %v280, %v287
        %v292 = vsub.f32 %v268, %v290
        %v293 = vmul.f32 %v292, 1.442695
        %v294 = vpow.pop %v293
        %v296 = vcombine.high %v294, %v294
        %v298 = vsel %vm273, %v294, 0.0
        %v299 = vrot.slane %v298, 4
        %v300 = vadd.f32 %v298, %v299
        %v301 = vrot.slane %v300, 2
        %v302 = vadd.f32 %v300, %v301
        %v303 = vrot.slane %v302, 1
        %v304 = vadd.f32 %v302, %v303
        %v305 = vsel %vm273, %v296, 0.0
        %v306 = vrot.slane %v305, 4
        %v307 = vadd.f32 %v305, %v306
        %v308 = vrot.slane %v307, 2
        %v309 = vadd.f32 %v307, %v308
        %v310 = vrot.slane %v309, 1
        %v311 = vadd.f32 %v309, %v310
        %v312 = vlog2.pop %v304
        %v313 = vmul.f32 %v312, 0.6931472
        %v314 = vlog2.pop %v311
        %v315 = vmul.f32 %v314, 0.6931472
        %v316 = vadd.f32 %v280, %v313
        %v317 = vadd.f32 %v287, %v315
        %v318 = vlaneseq
        %v319 = vshrl.u32 %v318, 7
        %v320 = vlaneseq
        %v321 = vshrl.u32 %v320, 7
        %v322 = vsub.s32 0, %v321
        %v323 = vrot.slane %v269, %v322
        %v324 = vlaneseq
        %v325 = vshrl.u32 %v324, 7
        %v326 = vsub.s32 1, %v325
        %v327 = vrot.slane %v269, %v326
        %vm328 = vcmp.eq.s32.totalorder %v319, %v323
        %vm329 = vcmp.eq.s32.totalorder %v319, %v327
        %v330 = vsel %vm328, 1, 0
        %v331 = vsel %vm329, 1, 0
        %v332 = vcvt.s32.f32 %v330
        %v333 = vcvt.s32.f32 %v331
        %v336 = vcombine.low %v332, %v333
        %v338 = vmul.f32 %v268, %v336
        %v340 = vcombine.high %v338, %v338
        %v342 = vsel %vm273, %v338, 0.0
        %v343 = vrot.slane %v342, 4
        %v344 = vadd.f32 %v342, %v343
        %v345 = vrot.slane %v344, 2
        %v346 = vadd.f32 %v344, %v345
        %v347 = vrot.slane %v346, 1
        %v348 = vadd.f32 %v346, %v347
        %v349 = vsel %vm273, %v340, 0.0
        %v350 = vrot.slane %v349, 4
        %v351 = vadd.f32 %v349, %v350
        %v352 = vrot.slane %v351, 2
        %v353 = vadd.f32 %v351, %v352
        %v354 = vrot.slane %v353, 1
        %v355 = vadd.f32 %v353, %v354
        %v356 = vlaneseq
        %v357 = vand.u32 %v356, 127
        %v358 = vadd.s32 %v357, 128
        %s359 = smul.u32 %s32, 256
        %v360 = vstv %s359
        %v361 = vadd.s32 %v360, %v357
        %v362 = vadd.s32 %v360, %v358
        %vm363 = vcmp.ne.s32.totalorder %v269, 255
        %vm364 = vcmp.ge.s32.totalorder %v269, 0
        %vm365 = vmand %vm363, %vm364
        %vm366 = vcmp.lt.s32.totalorder %v361, 256
        %vm367 = vcmp.lt.s32.totalorder %v362, 256
        %v368 = vsel %vm366, 1, 0
        %v369 = vsel %vm367, 1, 0
        %v370 = vcombine.low %v368, %v369
        %v372 = vunpack.c.l.s4 1966171168
        %v373 = vunpack.c.0.s8 %v372
        %v374 = vlaneseq
        %v375 = vshrl.u32 %v374, 7
        %v376 = vsub.s32 %v373, %v375
        %v377 = vrot.slane %v370, %v376
        %v379 = vunpack.c.l.s4 1966171168
        %v380 = vunpack.c.0.s8 %v379
        %v381 = vlaneseq
        %v382 = vshrl.u32 %v381, 7
        %v383 = vsub.s32 %v380, %v382
        %v384 = vrot.slane %v377, %v383
        %vm385 = vcmp.ne.s32.totalorder %v384, 0
        %vm386 = vmand %vm365, %vm385
        %v387 = vsel %vm386, 1, 0
        %v388 = vcvt.s32.f32 %v387
        %v389 = vsub.f32 %v316, %v348
        %v390 = vsub.f32 %v317, %v355
        %v393 = vcombine.low %v389, %v390
        %v395 = vunpack.c.l.s4 1966171168
        %v396 = vunpack.c.0.s8 %v395
        %v397 = vlaneseq
        %v398 = vshrl.u32 %v397, 7
        %v399 = vsub.s32 %v396, %v398
        %v400 = vrot.slane %v393, %v399
        %v402 = vunpack.c.l.s4 1966171168
        %v403 = vunpack.c.0.s8 %v402
        %v404 = vlaneseq
        %v405 = vshrl.u32 %v404, 7
        %v406 = vsub.s32 %v403, %v405
        %v407 = vrot.slane %v400, %v406
        %v409 = vsel %vm386, %v407, 0.0
        %v410 = vld [vmem:[%s248] sm:$0x3]
        %v411 = vadd.f32 %v410, %v409
        %v412 = vlaneseq
        %vm413 = vcmp.ge.s32.totalorder %v412, 0
        %vm414 = vcmp.lt.s32.totalorder %v412, 256
        %vm415 = vmand %vm413, %vm414
        %416 = vst.msk [vmem:[%s248] sm:$0x3] %vm415, %v411
        %v417 = vld [vmem:[%s255] sm:$0x3]
        %v418 = vadd.f32 %v417, %v388
        %419 = vst.msk [vmem:[%s255] sm:$0x3] %vm415, %v418
        %s420 = sand.u32 %s103, 1
        %s421 = scalar_lea.sflag [#allocation4], %s420
        %s422 = sand.u32 %s103, 1
        %s423 = smul.addr %s422, 2
        %s424 = scalar_lea.vmem [#allocation7], %s423
        %s425 = sand.u32 %s129, 1
        %s426 = scalar_lea.sflag [#allocation9], %s425
        %s427 = sand.u32 %s129, 1
        %s428 = smul.addr %s427, 2
        %s429 = scalar_lea.vmem [#allocation8], %s428
        // Predicated region
        $region41: #{tpu_custom_call.1} parent=27 // pred_check
          %p430 = pneg %p113
        $region42: #{tpu_custom_call.1} parent=27 // pred_check_branch
          %432 = sbr.rel (%p430) target = $region44
        $region43: #{tpu_custom_call.1} parent=27 // pred_region
          %s434 = ssub.s32 32, 32
          %435 = vsyncadd %s421, %s434
          %s436 = smul.addr %s31, 2
          %s437 = smul.addr %s436, 16
          %s438 = scalar_lea.hbm %s2, %s437
          %s440 = sshll.u32 %s424, 4
          %s441 = int_to_ptr.vmem [resolvable:$true] %s440
          %443 = dma.vmem_to_hbm [thread:$0]  %s441, 32, %s438, %s421
        $region44: #{tpu_custom_call.1} parent=27 // pred_fallthru
          _
        // Predicated region
        $region45: #{tpu_custom_call.1} parent=27 // pred_check
          %p444 = pneg %p139
        $region46: #{tpu_custom_call.1} parent=27 // pred_check_branch
          %446 = sbr.rel (%p444) target = $region48
        $region47: #{tpu_custom_call.1} parent=27 // pred_region
          %s448 = ssub.s32 32, 32
          %449 = vsyncadd %s426, %s448
          %s450 = smul.addr %s31, 2
          %s451 = smul.addr %s450, 16
          %s452 = scalar_lea.hbm %s3, %s451
          %s454 = sshll.u32 %s429, 4
          %s455 = int_to_ptr.vmem [resolvable:$true] %s454
          %457 = dma.vmem_to_hbm [thread:$0]  %s455, 32, %s452, %s426
        $region48: #{tpu_custom_call.1} parent=27 // pred_fallthru
          _
      $region28: #{tpu_custom_call.1} parent=5 // pred_fallthru
        _
      %p458 = scmp.le.s32.totalorder 2, %s22
      // Predicated region
      $region49: #{tpu_custom_call.1} parent=5 // pred_check
        %p459 = pneg %p458
      $region50: #{tpu_custom_call.1} parent=5 // pred_check_branch
        %461 = sbr.rel (%p459) target = $region52
      $region51: #{tpu_custom_call.1} parent=5 // pred_region
        %s462 = ssub.s32 %s22, 2
        // Predicated region
        $region53: #{tpu_custom_call.1} parent=51 // pred_check
          %p463 = pneg %p119
        $region54: #{tpu_custom_call.1} parent=51 // pred_check_branch
          %465 = sbr.rel (%p463) target = $region56
        $region55: #{tpu_custom_call.1} parent=51 // pred_region
          %s466 = sand.u32 %s104, 1
          %s467 = scalar_lea.sflag [#allocation4], %s466
          %s468 = sand.u32 %s104, 1
          %s469 = smul.addr %s468, 2
          %s470 = scalar_lea.vmem [#allocation7], %s469
          %471 = dma.done %s467, 32
        $region56: #{tpu_custom_call.1} parent=51 // pred_fallthru
          _
        // Predicated region
        $region57: #{tpu_custom_call.1} parent=51 // pred_check
          %p472 = pneg %p145
        $region58: #{tpu_custom_call.1} parent=51 // pred_check_branch
          %474 = sbr.rel (%p472) target = $region60
        $region59: #{tpu_custom_call.1} parent=51 // pred_region
          %s475 = sand.u32 %s130, 1
          %s476 = scalar_lea.sflag [#allocation9], %s475
          %s477 = sand.u32 %s130, 1
          %s478 = smul.addr %s477, 2
          %s479 = scalar_lea.vmem [#allocation8], %s478
          %480 = dma.done %s476, 32
        $region60: #{tpu_custom_call.1} parent=51 // pred_fallthru
          _
      $region52: #{tpu_custom_call.1} parent=5 // pred_fallthru
        _
    $region6: #{tpu_custom_call.1} parent=1 // loop_footer
      %s26 = sadd.s32 1, %s22
    $region7: #{tpu_custom_call.1} parent=1 // loop_footer_branch
      %21 = sbr.rel target = $region3
    $region8: #{tpu_custom_call.1} parent=1 // loop_exit
      _
    %481 = vsyncpa [#allocation3], 1
    %s482 = scalar_lea.sflag [#allocation3], 1
    %483 = vsyncpa %s482, 1
    %484 = vsyncpa [#allocation6], 1
    %s485 = scalar_lea.sflag [#allocation6], 1
    %486 = vsyncpa %s485, 1
    %487 = vsyncpa [#allocation4], 1
    %s488 = scalar_lea.sflag [#allocation4], 1
    %489 = vsyncpa %s488, 1
    %490 = vsyncpa [#allocation9], 1
    %s491 = scalar_lea.sflag [#allocation9], 1
    %492 = vsyncpa %s491, 1

</llo_original>
